<compile_context>
chip_gen: v5e
topology: v5e:2x2
jax: 0.10.0
libtpu: 0.0.40
codegen_flags: <defaults>
</compile_context>

<pallas_src>
import functools

import jax
import jax.numpy as jnp
from jax.experimental import pallas as pl
from jax.experimental.pallas import tpu as pltpu


def _conloss_kernel(t_idx_ref, nf_ref, lb_ref,   # (1, CT) i32, (Bt, 1) i32 x2
                    p1_ref, p2_ref,              # (Bt, CT) VMEM tiles
                    loss_ref,                    # (Bt, 1) f32 out
                    *, margin):
    diff = p1_ref[...].astype(jnp.float32) - p2_ref[...].astype(jnp.float32)

    # Frame mask: time index of each flattened (channel, time) column, compared
    # against this row's n_frames.  (1, CT) < (Bt, 1) broadcasts to (Bt, CT).
    mask = t_idx_ref[...] < nf_ref[...]
    sq = jnp.where(mask, diff * diff, 0.0)

    ssum = jnp.sum(sq, axis=1, keepdims=True)          # (Bt, 1)  == d**2
    d = jnp.sqrt(ssum)                                  # torch.dist(.., 2)

    pos_loss = ssum                                     # label != 0 -> d**2
    neg_loss = jnp.maximum(jnp.float32(margin) - d, 0.0) ** 2
    loss_ref[...] = jnp.where(lb_ref[...] != 0, pos_loss, neg_loss)


def _choose_bt(b, ct, itemsize, budget_bytes=40 << 20):
    """Pick a batch-tile size: 2 inputs x 2 pipeline buffers under budget."""
    per_row = 2 * 2 * ct * itemsize
    max_bt = max(8, budget_bytes // max(per_row, 1))
    if b <= max_bt:
        return b, b                     # single block == full array dim
    bt = (max_bt // 8) * 8              # multiple of 8 sublanes
    b_pad = ((b + bt - 1) // bt) * bt
    return bt, b_pad


def conloss(pred1, pred2, labels, n_frames, margin=0.99):
    """Pallas implementation of ConLoss.forward. Returns a scalar float32."""
    B, C, T = pred1.shape
    assert pred2.shape == (B, C, T)
    CT = C * T

    # Lane-dense layout: flatten (C, T) -> C*T on the last axis.
    p1 = pred1.reshape(B, CT)
    p2 = pred2.reshape(B, CT)
    nf = n_frames.astype(jnp.int32).reshape(B, 1)
    lb = labels.astype(jnp.int32).reshape(B, 1)

    itemsize = jnp.dtype(pred1.dtype).itemsize
    bt, b_pad = _choose_bt(B, CT, itemsize)
    if b_pad != B:
        pad = b_pad - B
        p1 = jnp.pad(p1, ((0, pad), (0, 0)))
        p2 = jnp.pad(p2, ((0, pad), (0, 0)))
        nf = jnp.pad(nf, ((0, pad), (0, 0)))
        lb = jnp.pad(lb, ((0, pad), (0, 0)))

    # Time index of every flattened column (channel-major, time minor).
    t_idx = (jnp.arange(CT, dtype=jnp.int32) % T).reshape(1, CT)

    kernel = functools.partial(_conloss_kernel, margin=float(margin))

    losses = pl.pallas_call(
        kernel,
        out_shape=jax.ShapeDtypeStruct((b_pad, 1), jnp.float32),
        grid_spec=pl.GridSpec(
            grid=(b_pad // bt,),
            in_specs=[
                pl.BlockSpec((1, CT), lambda i: (0, 0)),     # t_idx (resident)
                pl.BlockSpec((bt, 1), lambda i: (i, 0)),     # n_frames
                pl.BlockSpec((bt, 1), lambda i: (i, 0)),     # labels
                pl.BlockSpec((bt, CT), lambda i: (i, 0)),    # pred1
                pl.BlockSpec((bt, CT), lambda i: (i, 0)),    # pred2
            ],
            out_specs=pl.BlockSpec((bt, 1), lambda i: (i, 0)),
        ),
        compiler_params=pltpu.CompilerParams(
            # No cross-step accumulator -> batch axis is embarrassingly
            # parallel (engages both TensorCores on v7x).
            dimension_semantics=("parallel",),
            # Blocks are sized against ~40 MiB; raise the default scoped VMEM
            # limit (16 MiB on v5e / 32 MiB elsewhere) but stay under v7x's
            # 64 MiB physical VMEM.
            vmem_limit_bytes=48 << 20,
        ),
    )(t_idx, nf, lb, p1, p2)

    # Mean over the real (unpadded) batch.
    return jnp.mean(losses[:B, 0])


def _conloss_ref(pred1, pred2, labels, n_frames, margin=0.99):
    """Pure-JAX reference mirroring the PyTorch loop."""
    B = pred1.shape[0]
    losses = []
    for i in range(B):
        f = int(n_frames[i])
        diff = pred1[i, :, :f] - pred2[i, :, :f]
        d = jnp.sqrt(jnp.sum(diff * diff))
        if int(labels[i]) != 0:
            losses.append(d ** 2)
        else:
            losses.append(jnp.maximum(margin - d, 0.0) ** 2)
    return jnp.mean(jnp.stack(losses))


if __name__ == "__main__":
    key = jax.random.PRNGKey(0)
    k1, k2 = jax.random.split(key)

    B, C, T = 4, 8, 16
    pred1 = jax.random.normal(k1, (B, C, T), dtype=jnp.float32) * 0.1
    pred2 = jax.random.normal(k2, (B, C, T), dtype=jnp.float32) * 0.1
    labels = jnp.array([1, 0, 1, 0], dtype=jnp.int32)
    n_frames = jnp.array([16, 10, 7, 13], dtype=jnp.int32)

    out = conloss(pred1, pred2, labels, n_frames, margin=0.99)
    out = jax.block_until_ready(out)

    ref = _conloss_ref(pred1, pred2, labels, n_frames, margin=0.99)
    assert jnp.allclose(out, ref, rtol=1e-5, atol=1e-6), (out, ref)

    print("KERNEL_OK")
</pallas_src>

<mosaic_0001>
module attributes {stable_mosaic.version = 11 : i64} {
  func.func @_conloss_kernel(%arg0: i32, %arg1: memref<1x128xi32, #tpu.memory_space<vmem>>, %arg2: memref<4x1xi32, #tpu.memory_space<vmem>>, %arg3: memref<4x1xi32, #tpu.memory_space<vmem>>, %arg4: memref<4x128xf32, #tpu.memory_space<vmem>>, %arg5: memref<4x128xf32, #tpu.memory_space<vmem>>, %arg6: memref<4x1xf32, #tpu.memory_space<vmem>>) attributes {dimension_semantics = [#tpu.dimension_semantics<parallel>], iteration_bounds = array<i64: 1>, scalar_prefetch = 0 : i64, scratch_operands = 0 : i64, tpu.core_type = #tpu.core_type<tc>, window_params = [{pipeline_mode = #tpu.pipeline_mode<synchronous>, transform_indices = @transform_0, window_bounds = array<i64: 1, 128>}, {transform_indices = @transform_1, window_bounds = array<i64: 4, 1>}, {transform_indices = @transform_2, window_bounds = array<i64: 4, 1>}, {transform_indices = @transform_3, window_bounds = array<i64: 4, 128>}, {transform_indices = @transform_4, window_bounds = array<i64: 4, 128>}, {transform_indices = @transform_5, window_bounds = array<i64: 4, 1>}]} {
    %c0 = arith.constant 0 : index
    %c0_0 = arith.constant 0 : index
    %0 = vector.load %arg4[%c0, %c0_0] : memref<4x128xf32, #tpu.memory_space<vmem>>, vector<4x128xf32>
    %c0_1 = arith.constant 0 : index
    %c0_2 = arith.constant 0 : index
    %1 = vector.load %arg5[%c0_1, %c0_2] : memref<4x128xf32, #tpu.memory_space<vmem>>, vector<4x128xf32>
    %2 = arith.subf %0, %1 : vector<4x128xf32>
    %c0_3 = arith.constant 0 : index
    %c0_4 = arith.constant 0 : index
    %3 = vector.load %arg1[%c0_3, %c0_4] : memref<1x128xi32, #tpu.memory_space<vmem>>, vector<1x128xi32>
    %c0_5 = arith.constant 0 : index
    %c0_6 = arith.constant 0 : index
    %4 = vector.load %arg2[%c0_5, %c0_6] : memref<4x1xi32, #tpu.memory_space<vmem>>, vector<4x1xi32>
    %5 = vector.broadcast %3 : vector<1x128xi32> to vector<4x128xi32>
    %6 = vector.broadcast %4 : vector<4x1xi32> to vector<4x128xi32>
    %7 = arith.cmpi slt, %5, %6 : vector<4x128xi32>
    %8 = arith.mulf %2, %2 : vector<4x128xf32>
    %cst = arith.constant 0.000000e+00 : f32
    %9 = vector.broadcast %cst : f32 to vector<4x128xf32>
    %10 = arith.select %7, %8, %9 : vector<4x128xi1>, vector<4x128xf32>
    %cst_7 = arith.constant dense<0.000000e+00> : vector<4xf32>
    %11 = vector.multi_reduction <add>, %10, %cst_7 [1] : vector<4x128xf32> to vector<4xf32>
    %12 = vector.shape_cast %11 : vector<4xf32> to vector<4x1xf32>
    %13 = math.sqrt %12 : vector<4x1xf32>
    %cst_8 = arith.constant 9.900000e-01 : f32
    %14 = vector.broadcast %cst_8 : f32 to vector<4x1xf32>
    %15 = arith.subf %14, %13 : vector<4x1xf32>
    %cst_9 = arith.constant 0.000000e+00 : f32
    %16 = vector.broadcast %cst_9 : f32 to vector<4x1xf32>
    %17 = arith.maximumf %15, %16 : vector<4x1xf32>
    %18 = arith.mulf %17, %17 : vector<4x1xf32>
    %c0_10 = arith.constant 0 : index
    %c0_11 = arith.constant 0 : index
    %19 = vector.load %arg3[%c0_10, %c0_11] : memref<4x1xi32, #tpu.memory_space<vmem>>, vector<4x1xi32>
    %c0_i32 = arith.constant 0 : i32
    %20 = vector.broadcast %c0_i32 : i32 to vector<4x1xi32>
    %21 = arith.cmpi ne, %19, %20 : vector<4x1xi32>
    %22 = arith.select %21, %12, %18 : vector<4x1xi1>, vector<4x1xf32>
    %c0_12 = arith.constant 0 : index
    %c0_13 = arith.constant 0 : index
    %23 = vector.load %arg6[%c0_12, %c0_13] : memref<4x1xf32, #tpu.memory_space<vmem>>, vector<4x1xf32>
    tpu.vector_store %arg6[%c0_12, %c0_13], %22 {strides = array<i32>} : memref<4x1xf32, #tpu.memory_space<vmem>>, vector<4x1xf32>,
    return
  }
  func.func @transform_0(%arg0: i32) -> (i32, i32) {
    %c0_i32 = arith.constant 0 : i32
    %c0_i32_0 = arith.constant 0 : i32
    %c0_i32_1 = arith.constant 0 : i32
    return %c0_i32, %c0_i32_0 : i32, i32
  }
  func.func @transform_1(%arg0: i32) -> (i32, i32) {
    %c0_i32 = arith.constant 0 : i32
    %c0_i32_0 = arith.constant 0 : i32
    return %arg0, %c0_i32 : i32, i32
  }
  func.func @transform_2(%arg0: i32) -> (i32, i32) {
    %c0_i32 = arith.constant 0 : i32
    %c0_i32_0 = arith.constant 0 : i32
    return %arg0, %c0_i32 : i32, i32
  }
  func.func @transform_3(%arg0: i32) -> (i32, i32) {
    %c0_i32 = arith.constant 0 : i32
    %c0_i32_0 = arith.constant 0 : i32
    return %arg0, %c0_i32 : i32, i32
  }
  func.func @transform_4(%arg0: i32) -> (i32, i32) {
    %c0_i32 = arith.constant 0 : i32
    %c0_i32_0 = arith.constant 0 : i32
    return %arg0, %c0_i32 : i32, i32
  }
  func.func @transform_5(%arg0: i32) -> (i32, i32) {
    %c0_i32 = arith.constant 0 : i32
    %c0_i32_0 = arith.constant 0 : i32
    return %arg0, %c0_i32 : i32, i32
  }
}

</mosaic_0001>

<llo_original>
// kernel: tpu_custom_call.1
$region0: #{tpu_custom_call.1}
  #allocation0 [shape = 'u32[]', space=smem, size = 0x4, offset = 0x4, fixed_abs, tag = 'smem constant byte address 0x4 - core index']
  #allocation1 [shape = 'u32[72,128]{1,0:T(1,128)}', space=vmem, size = 0x9000, scoped, tag = 'internal scratch']
  %s0 = inlined_call_operand.vmem [shape: s32[1,128], index: 0, kind: input, shape index: {}]
  %s1 = inlined_call_operand.vmem [shape: s32[4,1], index: 1, kind: input, shape index: {}]
  %s2 = inlined_call_operand.vmem [shape: s32[4,1], index: 2, kind: input, shape index: {}]
  %s3 = inlined_call_operand.vmem [shape: f32[4,128], index: 3, kind: input, shape index: {}]
  %s4 = inlined_call_operand.vmem [shape: f32[4,128], index: 4, kind: input, shape index: {}]
  %s5 = inlined_call_operand.vmem [shape: f32[4,1], index: 5, kind: output, shape index: {}]
  %s6 = sld [smem:[#allocation0]]
  $region30: #{tpu_custom_call.1} parent=0
    _
  %s8 = ssub.s32 1, %s6
  %s9 = scalar_select 0, %s8, %s6
  // Predicated region
  $region2: #{tpu_custom_call.1} parent=0 // pred_check
    _
  $region3: #{tpu_custom_call.1} parent=0 // pred_check_branch
    %11 = sbr.rel (0) target = $region5
  $region4: #{tpu_custom_call.1} parent=0 // pred_region
    _
  $region5: #{tpu_custom_call.1} parent=0 // pred_fallthru
    _
  // Predicated region
  $region6: #{tpu_custom_call.1} parent=0 // pred_check
    _
  $region7: #{tpu_custom_call.1} parent=0 // pred_check_branch
    %13 = sbr.rel (0) target = $region9
  $region8: #{tpu_custom_call.1} parent=0 // pred_region
    _
  $region9: #{tpu_custom_call.1} parent=0 // pred_fallthru
    _
  // Predicated region
  $region10: #{tpu_custom_call.1} parent=0 // pred_check
    _
  $region11: #{tpu_custom_call.1} parent=0 // pred_check_branch
    %15 = sbr.rel (0) target = $region13
  $region12: #{tpu_custom_call.1} parent=0 // pred_region
    _
  $region13: #{tpu_custom_call.1} parent=0 // pred_fallthru
    _
  // Predicated region
  $region14: #{tpu_custom_call.1} parent=0 // pred_check
    _
  $region15: #{tpu_custom_call.1} parent=0 // pred_check_branch
    %17 = sbr.rel (0) target = $region17
  $region16: #{tpu_custom_call.1} parent=0 // pred_region
    _
  $region17: #{tpu_custom_call.1} parent=0 // pred_fallthru
    _
  // Predicated region
  $region18: #{tpu_custom_call.1} parent=0 // pred_check
    _
  $region19: #{tpu_custom_call.1} parent=0 // pred_check_branch
    %19 = sbr.rel (0) target = $region21
  $region20: #{tpu_custom_call.1} parent=0 // pred_region
    _
  $region21: #{tpu_custom_call.1} parent=0 // pred_fallthru
    _
  %v20 = vld [vmem:[%s3] sm:$0xf]
  %v21 = vld [vmem:[%s4] sm:$0xf]
  %v22 = vsub.f32 %v20, %v21
  %v23 = vld [vmem:[%s0] sm:$0x1]
  %v24 = vld [vmem:[%s1] sm:$0xf]
  %v25 = vperm.slane %v23, 0
  %26 = vset.pattern.permute.xlu0 0
  %27 = vperm.xlu0 %26, %v24
  %v28 = vpop.permute.xlu0 %27
  %vm29 = vcmp.lt.s32.totalorder %v25, %v28
  %v30 = vmul.f32 %v22, %v22
  %v31 = vsel %vm29, %v30, 0.0
  %vm32 = vcmask 1043456
  %v33 = vsel %vm32, %v31, 0.0
  %34 = vadd.xlane.f32.xlu0 %v33
  %v35 = vpop.xlane.xlu0 %34
  %v36 = vrsqrt.pop %v35
  %v37 = vmul.f32 %v36, %v35
  %v38 = vmul.f32 %v37, %v36
  %v39 = vmul.f32 0.5, %v38
  %v40 = vsub.f32 1.5, %v39
  %v41 = vmul.f32 %v36, %v40
  %v42 = vmul.f32 %v35, %v41
  %vm43 = vcmp.eq.f32.partialorder %v35, inf
  %v44 = vsel %vm43, %v35, %v42
  %vm45 = vcmp.eq.f32.partialorder %v35, 0.0
  %v46 = vand.u32 %v35, 2147483648
  %v47 = vsel %vm45, %v46, %v44
  %v48 = vsub.f32 0.99, %v47
  %v49 = vmax.f32 %v48, 0.0
  %v50 = vmul.f32 %v49, %v49
  %v51 = vld [vmem:[%s2] sm:$0xf]
  %vm52 = vcmp.ne.s32.totalorder %v51, 0
  %v53 = vsel %vm52, %v35, %v50
  %vm54 = vcmask 3072
  %55 = vst.msk [vmem:[%s5] sm:$0xf] %vm54, %v53
  // Predicated region
  $region22: #{tpu_custom_call.1} parent=0 // pred_check
    _
  $region23: #{tpu_custom_call.1} parent=0 // pred_check_branch
    %57 = sbr.rel (0) target = $region25
  $region24: #{tpu_custom_call.1} parent=0 // pred_region
    _
  $region25: #{tpu_custom_call.1} parent=0 // pred_fallthru
    _
  // Predicated region
  $region26: #{tpu_custom_call.1} parent=0 // pred_check
    _
  $region27: #{tpu_custom_call.1} parent=0 // pred_check_branch
    %59 = sbr.rel (0) target = $region29
  $region28: #{tpu_custom_call.1} parent=0 // pred_region
    _
  $region29: #{tpu_custom_call.1} parent=0 // pred_fallthru
    _

</llo_original>
